<compile_context>
chip_gen: v7x
topology: tpu7x:2x2x1
jax: 0.10.0
libtpu: 0.0.40
codegen_flags: <defaults>
</compile_context>

<pallas_src>
import math
from functools import partial

import jax
import jax.numpy as jnp
from jax.experimental import pallas as pl
from jax.experimental.pallas import tpu as pltpu
from jax.scipy.linalg import block_diag

ACT_DT = jnp.bfloat16            # storage dtype for activations & matmul weights


def _detect_vmem_bytes():
    try:
        info = pltpu.get_tpu_info()
        return int(getattr(info, "vmem_capacity_bytes", 64 * 2**20))
    except Exception:
        return 64 * 2**20


_VMEM_CAP = _detect_vmem_bytes()
if _VMEM_CAP >= 100 * 2**20:          # v5e / v6e: 128 MiB VMEM per TensorCore
    VMEM_LIMIT = 96 * 2**20
    MM_TILE = 1024
else:                                 # v7x: 64 MiB VMEM per TensorCore
    VMEM_LIMIT = 48 * 2**20
    MM_TILE = 512


def _round_up(n, m):
    return ((n + m - 1) // m) * m


def _apply_act(y, act):
    if act == "relu":
        return jnp.maximum(y, 0.0)
    if act == "relu6":
        return jnp.clip(y, 0.0, 6.0)
    if act == "hswish":
        return y * jnp.clip(y + 3.0, 0.0, 6.0) * (1.0 / 6.0)
    return y  # None


# ----------------------------------------------------------------------------
# Pallas kernels
# ----------------------------------------------------------------------------
def matmul_bias_act_kernel(*refs, act, has_residual):
    # x: (TILE, K) bf16, w: (K, Cout) bf16 (BN scale folded in), t: (1, Cout) f32,
    # optional residual r: (TILE, Cout) bf16 fused into the f32 epilogue.
    if has_residual:
        x_ref, w_ref, t_ref, r_ref, o_ref = refs
    else:
        x_ref, w_ref, t_ref, o_ref = refs
    y = jnp.dot(x_ref[...], w_ref[...], preferred_element_type=jnp.float32)
    y = y + t_ref[...]
    if has_residual:
        y = y + r_ref[...].astype(jnp.float32)
    o_ref[...] = _apply_act(y, act).astype(o_ref.dtype)


def matmul_bias_act(x, w, shift, act, residual=None):
    """out = act(x @ w + shift [+ residual]); row-tiled bf16 MXU matmul, f32 acc."""
    N, K = x.shape
    Cout = w.shape[1]
    x = x.astype(ACT_DT)
    r = None if residual is None else residual.astype(ACT_DT)
    tile = MM_TILE                         # generation-aware row tile
    if N < tile:                           # tiny layers: one sublane-aligned block
        tile = max(8, _round_up(N, 8))
        if tile > N:
            x = jnp.pad(x, ((0, tile - N), (0, 0)))
            if r is not None:
                r = jnp.pad(r, ((0, tile - N), (0, 0)))
    grid = (pl.cdiv(x.shape[0], tile),)    # short last tile handled by Pallas masking
    in_specs = [
        pl.BlockSpec((tile, K), lambda i: (i, 0)),
        pl.BlockSpec((K, Cout), lambda i: (0, 0)),
        pl.BlockSpec((1, Cout), lambda i: (0, 0)),
    ]
    args = [x, w.astype(ACT_DT), shift.reshape(1, -1).astype(jnp.float32)]
    if r is not None:
        in_specs.append(pl.BlockSpec((tile, Cout), lambda i: (i, 0)))
        args.append(r)
    # TODO(synk): pad Cout<128 heads (DAG head hid=32/cout=8) to 128 lanes to avoid
    # masked partial stores, or batch several small heads into one call.
    out = pl.pallas_call(
        partial(matmul_bias_act_kernel, act=act, has_residual=r is not None),
        out_shape=jax.ShapeDtypeStruct((x.shape[0], Cout), ACT_DT),
        grid=grid,
        in_specs=in_specs,
        out_specs=pl.BlockSpec((tile, Cout), lambda i: (i, 0)),
        compiler_params=pltpu.CompilerParams(
            dimension_semantics=("parallel",),
            vmem_limit_bytes=VMEM_LIMIT),
    )(*args)
    return out[:N]


def dwconv_bias_act_kernel(x_ref, w_ref, t_ref, o_ref, pad_ref, *, act, k, stride, pad):
    # x: (1, H, W, TC) unpadded bf16 image block; w: (k*k, TC) bf16 (BN scale folded);
    # t: (1, TC) f32; o: (1, Ho, Wo, TC); pad_ref: VMEM staging block that provides
    # the zero halo (no HBM pad round trip).  Taps are (strided) reads of the VMEM
    # block; per-tap multiplies run in bf16, accumulation in f32.
    H, W = x_ref.shape[1], x_ref.shape[2]
    ho, wo = o_ref.shape[1], o_ref.shape[2]
    pad_ref[...] = jnp.zeros(pad_ref.shape, pad_ref.dtype)
    pad_ref[pad:pad + H, pad:pad + W, :] = x_ref[0]
    wv = w_ref[...]                                      # (k*k, TC) bf16
    acc = jnp.zeros(o_ref.shape[1:], jnp.float32)
    for tap in range(k * k):
        kh, kw = divmod(tap, k)
        if stride == 1:
            xs = pad_ref[kh:kh + ho, kw:kw + wo, :]
        else:
            xs = pad_ref[pl.ds(kh, ho, stride), pl.ds(kw, wo, stride), :]
        acc = acc + (xs * wv[tap, :]).astype(jnp.float32)
    y = acc + t_ref[0, :]
    o_ref[0] = _apply_act(y, act).astype(o_ref.dtype)


def depthwise_conv(x, w, shift, act, stride, pad):
    """Depthwise KxK conv, stride handled in-kernel; w: (k, k, C) with BN scale folded."""
    k = w.shape[0]
    B, H, W, C = x.shape
    Ho = (H + 2 * pad - k) // stride + 1
    Wo = (W + 2 * pad - k) // stride + 1
    TC = C if C <= 128 else 128              # channel tile bounds per-block VMEM
    # TODO(synk): for production resolutions the whole-image block should become a
    # halo row-tiled manual-DMA pipeline (grid (B, H/TH, C/128)) to bound per-step VMEM.
    out = pl.pallas_call(
        partial(dwconv_bias_act_kernel, act=act, k=k, stride=stride, pad=pad),
        out_shape=jax.ShapeDtypeStruct((B, Ho, Wo, C), ACT_DT),
        grid=(B, pl.cdiv(C, TC)),
        in_specs=[
            pl.BlockSpec((1, H, W, TC), lambda b, c: (b, 0, 0, c)),
            pl.BlockSpec((k * k, TC), lambda b, c: (0, c)),
            pl.BlockSpec((1, TC), lambda b, c: (0, c)),
        ],
        out_specs=pl.BlockSpec((1, Ho, Wo, TC), lambda b, c: (b, 0, 0, c)),
        scratch_shapes=[pltpu.VMEM((H + 2 * pad, W + 2 * pad, TC), ACT_DT)],
        compiler_params=pltpu.CompilerParams(
            dimension_semantics=("parallel", "parallel"),
            vmem_limit_bytes=VMEM_LIMIT),
    )(x.astype(ACT_DT), w.reshape(k * k, C).astype(ACT_DT),
      shift.reshape(1, -1).astype(jnp.float32))
    return out


def lite_mla_kernel(qkv_ref, agg_ref, w_ref, o_ref, *, dim, eps):
    # qkv/agg: (1, h, HW, 3*dim) bf16; w: (h, 3*dim, 3*dim) bf16 per-head grouped 1x1
    # aggregation weights; o: (1, h, HW, 2*dim) with the qkv branch in lanes [:dim]
    # and the aggregated branch in lanes [dim:].  The two branches are processed
    # separately (no (2h,n,3d) f32 concat), intermediates stay bf16 until the dots.
    def attention(x):                                      # x: (h, n, 3*dim) bf16
        q = jnp.maximum(x[..., :dim], 0)
        k = jnp.maximum(x[..., dim:2 * dim], 0)
        v = x[..., 2 * dim:]
        # ones-column trick: [v | 1] makes one q @ kv matmul yield num & denominator
        v1 = jnp.concatenate([v, jnp.ones_like(v[..., :1])], axis=-1)
        kv = jax.lax.dot_general(k, v1, (((1,), (1,)), ((0,), (0,))),
                                 preferred_element_type=jnp.float32)   # (h, d, d+1)
        nd = jax.lax.dot_general(q, kv.astype(ACT_DT), (((2,), (1,)), ((0,), (0,))),
                                 preferred_element_type=jnp.float32)   # (h, n, d+1)
        return nd[..., :dim] * pl.reciprocal(nd[..., dim:] + eps, approx=True)

    out_qkv = attention(qkv_ref[0])                                     # (h, n, d)
    # grouped 1x1 projection of the 5x5-aggregated branch, fused into this kernel
    aggp = jax.lax.dot_general(agg_ref[0], w_ref[...],
                               (((2,), (1,)), ((0,), (0,))),
                               preferred_element_type=jnp.float32).astype(ACT_DT)
    out_agg = attention(aggp)                                           # (h, n, d)
    o_ref[0] = jnp.concatenate([out_qkv, out_agg], axis=-1).astype(o_ref.dtype)


def lite_mla_attention(qkv_h, agg_h, w, dim, eps):
    B, h, HW, D3 = qkv_h.shape
    # TODO(synk): split the grid to (B, head_groups) for v7x's two TensorCores and
    # read straight from the (B, HW, heads*3dim) layout to kill the HBM transposes.
    return pl.pallas_call(
        partial(lite_mla_kernel, dim=dim, eps=eps),
        out_shape=jax.ShapeDtypeStruct((B, h, HW, 2 * dim), ACT_DT),
        grid=(B,),
        in_specs=[
            pl.BlockSpec((1, h, HW, D3), lambda b: (b, 0, 0, 0)),
            pl.BlockSpec((1, h, HW, D3), lambda b: (b, 0, 0, 0)),
            pl.BlockSpec((h, D3, D3), lambda b: (0, 0, 0)),
        ],
        out_specs=pl.BlockSpec((1, h, HW, 2 * dim), lambda b: (b, 0, 0, 0)),
        compiler_params=pltpu.CompilerParams(
            dimension_semantics=("parallel",),
            vmem_limit_bytes=VMEM_LIMIT),
    )(qkv_h.astype(ACT_DT), agg_h.astype(ACT_DT), w.astype(ACT_DT))


# ----------------------------------------------------------------------------
# Conv helpers (glue in JAX, compute in Pallas)
# ----------------------------------------------------------------------------
def pointwise_conv(x, w, shift, act, residual=None):
    B, H, W, C = x.shape
    r = None if residual is None else residual.reshape(B * H * W, -1)
    y = matmul_bias_act(x.reshape(B * H * W, C), w, shift, act, residual=r)
    return y.reshape(B, H, W, -1)


def full_conv(x, w, shift, act, stride, pad):
    # only used for the 3-channel stem: im2col (k*k*Cin = 27) then the fused matmul
    # TODO(synk): fold the im2col into the matmul kernel (overlapping blocks) to avoid
    # the 9x patch blow-up in HBM at the highest resolution.
    k = w.shape[0]
    Cout = w.shape[-1]
    B, H, Wd, C = x.shape
    xp = jnp.pad(x.astype(ACT_DT), ((0, 0), (pad, pad), (pad, pad), (0, 0)))
    Ho = (H + 2 * pad - k) // stride + 1
    Wo = (Wd + 2 * pad - k) // stride + 1
    cols = []
    for kh in range(k):
        for kw in range(k):
            cols.append(xp[:, kh:kh + stride * Ho:stride,
                           kw:kw + stride * Wo:stride, :])
    patches = jnp.stack(cols, axis=-2).reshape(B * Ho * Wo, k * k * C)
    y = matmul_bias_act(patches, w.reshape(k * k * C, Cout), shift, act)
    return y.reshape(B, Ho, Wo, Cout)


def upsample_nearest(x, factor):
    x = jnp.repeat(x, factor, axis=1)
    return jnp.repeat(x, factor, axis=2)


# ----------------------------------------------------------------------------
# Parameter construction (deterministic; BN scale folded into weights)
# ----------------------------------------------------------------------------
class PG:
    def __init__(self, key):
        self.key = key

    def take(self, shape, std=0.1):
        self.key, sub = jax.random.split(self.key)
        return jax.random.normal(sub, shape, jnp.float32) * std


def make_affine(pg, c, has_norm, has_bias):
    """Fold (optional) conv bias + eval-mode BatchNorm2d into (scale, shift)."""
    bias = pg.take((c,)) if has_bias else jnp.zeros((c,), jnp.float32)
    if has_norm:
        gamma = 1.0 + 0.1 * pg.take((c,))
        beta = 0.1 * pg.take((c,))
        mean = 0.1 * pg.take((c,))
        var = 1.0 + 0.1 * jnp.abs(pg.take((c,)))
        scale = gamma / jnp.sqrt(var + 1e-5)
        shift = beta + (bias - mean) * scale
    else:
        scale = jnp.ones((c,), jnp.float32)
        shift = bias
    return scale, shift


def fold_pw(w, scale):      # (Cin, Cout): BN scale folded along Cout, stored bf16
    return (w * scale[None, :]).astype(ACT_DT)


def fold_full(w, scale):    # (k, k, Cin, Cout)
    return (w * scale[None, None, None, :]).astype(ACT_DT)


def fold_dw(w, scale):      # (k, k, C): per-channel scale commutes with depthwise
    return (w * scale[None, None, :]).astype(ACT_DT)


def make_mbconv(pg, cin, cout, stride, expand_ratio, fewer_norm, act):
    mid = int(round(cin * expand_ratio))
    use_bias = (True, True, False) if fewer_norm else (False, False, False)
    has_norm = (False, False, True) if fewer_norm else (True, True, True)
    p = {"stride": stride, "act": act}
    w = pg.take((cin, mid), std=1.0 / math.sqrt(cin))
    s, t = make_affine(pg, mid, has_norm[0], use_bias[0])
    p["inv_w"], p["inv_t"] = fold_pw(w, s), t
    w = pg.take((3, 3, mid), std=1.0 / 3.0)
    s, t = make_affine(pg, mid, has_norm[1], use_bias[1])
    p["dw_w"], p["dw_t"] = fold_dw(w, s), t
    w = pg.take((mid, cout), std=1.0 / math.sqrt(mid))
    s, t = make_affine(pg, cout, has_norm[2], use_bias[2])
    p["pw_w"], p["pw_t"] = fold_pw(w, s), t
    return p


def make_dsconv(pg, cin, cout, stride, fewer_norm, act):
    use_bias = (True, False) if fewer_norm else (False, False)
    has_norm = (False, True) if fewer_norm else (True, True)
    p = {"stride": stride, "act": act}
    w = pg.take((3, 3, cin), std=1.0 / 3.0)
    s, t = make_affine(pg, cin, has_norm[0], use_bias[0])
    p["dw_w"], p["dw_t"] = fold_dw(w, s), t
    w = pg.take((cin, cout), std=1.0 / math.sqrt(cin))
    s, t = make_affine(pg, cout, has_norm[1], use_bias[1])
    p["pw_w"], p["pw_t"] = fold_pw(w, s), t
    return p


def make_litemla(pg, cin, cout, dim):
    heads = cin // dim
    total = heads * dim
    p = {"dim": dim, "heads": heads, "eps": 1e-15}
    p["qkv_w"] = pg.take((cin, 3 * total), std=1.0 / math.sqrt(cin)).astype(ACT_DT)
    p["qkv_t"] = jnp.zeros((3 * total,), jnp.float32)
    p["agg_dw_w"] = pg.take((5, 5, 3 * total), std=1.0 / 5.0).astype(ACT_DT)
    p["agg_dw_t"] = jnp.zeros((3 * total,), jnp.float32)
    # grouped 1x1 aggregation weights, kept per-head (no dense (3*total)^2 matrix)
    blocks = pg.take((3 * heads, dim, dim), std=1.0 / math.sqrt(dim))
    per_head = [block_diag(blocks[3 * h], blocks[3 * h + 1], blocks[3 * h + 2])
                for h in range(heads)]
    p["agg_pw_w"] = jnp.stack(per_head, 0).astype(ACT_DT)   # (heads, 3*dim, 3*dim)
    w = pg.take((2 * total, cout), std=1.0 / math.sqrt(2 * total))
    s, t = make_affine(pg, cout, True, False)
    p["proj_w"], p["proj_t"] = fold_pw(w, s), t
    return p


def make_vit_block(pg, cin, dim, expand_ratio, act):
    return {
        "mla": make_litemla(pg, cin, cin, dim),
        "mb": make_mbconv(pg, cin, cin, 1, expand_ratio, True, act),
    }


def make_backbone(pg, width_list, depth_list, in_channels=3, dim=16,
                  expand_ratio=4, act="hswish"):
    params = {}
    w = pg.take((3, 3, in_channels, width_list[0]),
                std=1.0 / math.sqrt(9 * in_channels))
    s, t = make_affine(pg, width_list[0], True, False)
    stem = {"conv_w": fold_full(w, s), "conv_t": t, "act": act}
    stem["blocks"] = [make_dsconv(pg, width_list[0], width_list[0], 1, False, act)
                      for _ in range(depth_list[0])]
    params["stem"] = stem

    cin = width_list[0]
    stages = []
    for w_, d in zip(width_list[1:3], depth_list[1:3]):
        blocks = []
        for i in range(d):
            stride = 2 if i == 0 else 1
            blocks.append({"type": "mb",
                           "p": make_mbconv(pg, cin, w_, stride, expand_ratio, False, act),
                           "residual": stride == 1})
            cin = w_
        stages.append(blocks)
    for w_, d in zip(width_list[3:], depth_list[3:]):
        blocks = [{"type": "mb",
                   "p": make_mbconv(pg, cin, w_, 2, expand_ratio, True, act),
                   "residual": False}]
        cin = w_
        for _ in range(d):
            blocks.append({"type": "vit",
                           "p": make_vit_block(pg, cin, dim, expand_ratio, act)})
        stages.append(blocks)
    params["stages"] = stages
    return params


def make_conv1x1(pg, cin, cout, act=None, norm=True):
    w = pg.take((cin, cout), std=1.0 / math.sqrt(cin))
    s, t = make_affine(pg, cout, norm, not norm)
    return {"w": fold_pw(w, s), "t": t, "act": act}


def make_dag_head(pg, c_final, c_mid_in, hid, cout, act):
    return {
        "in_final": make_conv1x1(pg, c_final, hid),
        "in_mid": make_conv1x1(pg, c_mid_in, hid),
        "middle": make_mbconv(pg, hid, hid, 1, 4, False, act),
        "out": make_conv1x1(pg, hid, cout),
    }


# ----------------------------------------------------------------------------
# Block / backbone / DAGBlock forward (NHWC inside)
# ----------------------------------------------------------------------------
def mbconv_forward(x, p, residual=None):
    k = p["dw_w"].shape[0]
    y = pointwise_conv(x, p["inv_w"], p["inv_t"], p["act"])
    y = depthwise_conv(y, p["dw_w"], p["dw_t"], p["act"], p["stride"], k // 2)
    return pointwise_conv(y, p["pw_w"], p["pw_t"], None, residual=residual)


def dsconv_forward(x, p, residual=None):
    k = p["dw_w"].shape[0]
    y = depthwise_conv(x, p["dw_w"], p["dw_t"], p["act"], p["stride"], k // 2)
    return pointwise_conv(y, p["pw_w"], p["pw_t"], None, residual=residual)


def litemla_forward(x, p, residual=None):
    B, H, W, _ = x.shape
    dim, heads = p["dim"], p["heads"]
    qkv = pointwise_conv(x, p["qkv_w"], p["qkv_t"], None)                  # (B,H,W,3*total)
    aggdw = depthwise_conv(qkv, p["agg_dw_w"], p["agg_dw_t"], None, 1, 2)  # 5x5 dw branch
    HW = H * W

    def to_heads(t):
        # TODO(synk): feed the (B,HW,heads*3dim) layout straight into the kernel
        # (per-head lane-dense blocks) to remove these HBM transposes.
        return t.reshape(B, HW, heads, 3 * dim).transpose(0, 2, 1, 3)      # (B,h,HW,3d)

    out = lite_mla_attention(to_heads(qkv), to_heads(aggdw), p["agg_pw_w"],
                             dim, p["eps"])                                # (B,h,HW,2d)
    out = out.transpose(0, 2, 1, 3).reshape(B, H, W, 2 * heads * dim)
    return pointwise_conv(out, p["proj_w"], p["proj_t"], None, residual=residual)


def backbone_forward_nhwc(x, params):
    out = {}
    stem = params["stem"]
    y = full_conv(x, stem["conv_w"], stem["conv_t"], stem["act"], stride=2, pad=1)
    for bp in stem["blocks"]:
        y = dsconv_forward(y, bp, residual=y)            # residual fused in final 1x1
    out["stage0"] = y
    for sid, stage in enumerate(params["stages"], 1):
        for blk in stage:
            if blk["type"] == "mb":
                y = mbconv_forward(y, blk["p"],
                                   residual=y if blk["residual"] else None)
            else:  # EfficientViTBlock: context (LiteMLA) + local (MBConv), residual
                y = litemla_forward(y, blk["p"]["mla"], residual=y)
                y = mbconv_forward(y, blk["p"]["mb"], residual=y)
        out["stage%d" % sid] = y
    out["stage_final"] = y
    return out


def dag_block_forward(feature_dict, input_ops, merge, post_input, middle, output_ops):
    """DAGBlock.forward: input ops -> merge ('add'/'cat' on channels) -> optional
    post_input -> middle -> output ops written back into the dict.  For 'add' the
    running sum is threaded through each input op so it can be fused into that op's
    matmul epilogue (no separate HBM add passes)."""
    if merge == "add":
        feat = None
        for key, op in input_ops:
            feat = op(feature_dict[key], feat)
    elif merge == "cat":
        feat = jnp.concatenate([op(feature_dict[key], None) for key, op in input_ops],
                               axis=-1)                  # channels-last == PyTorch dim=1
    else:
        raise NotImplementedError(merge)
    if post_input is not None:
        feat = post_input(feat)
    feat = middle(feat)
    for key, op in output_ops:
        feature_dict[key] = op(feat)
    return feature_dict


def _conv1x1_op(p):
    def op(t, r=None):
        return pointwise_conv(t, p["w"], p["t"], p["act"], residual=r)
    return op


def _upsampled_conv1x1_op(p, factor):
    # TODO(synk): fuse the nearest upsample into the conv's output index_map instead
    # of the two jnp.repeat passes.
    def op(t, r=None):
        y = upsample_nearest(pointwise_conv(t, p["w"], p["t"], p["act"]), factor)
        return y if r is None else y + r
    return op


def dag_head_apply(feature_dict, head):
    """SegHead-style DAGBlock: two backbone stages -> 1x1 conv (+ nearest 2x upsample
    for the deeper one), merge='add' (fused into the second conv), middle = residual
    MBConv (residual fused), one output head."""
    input_ops = [
        ("stage_final", _upsampled_conv1x1_op(head["in_final"], 2)),
        ("stage2", _conv1x1_op(head["in_mid"])),   # 'add' merge fused as residual
    ]
    output_ops = [("segout", _conv1x1_op(head["out"]))]
    middle = lambda t: mbconv_forward(t, head["middle"], residual=t)
    return dag_block_forward(feature_dict, input_ops, "add", None, middle, output_ops)


def model_forward(x_nchw, params):
    """Public wrapper: NCHW in, dict of NCHW tensors out (PyTorch convention)."""
    x = jnp.transpose(x_nchw, (0, 2, 3, 1)).astype(ACT_DT)   # NCHW -> NHWC bf16
    feats = backbone_forward_nhwc(x, params["backbone"])
    feats = dag_head_apply(feats, params["head"])
    res = {"input": x_nchw}
    for k, v in feats.items():
        res[k] = jnp.transpose(v, (0, 3, 1, 2)).astype(jnp.float32)  # NHWC -> NCHW
    return res


# ----------------------------------------------------------------------------
if __name__ == "__main__":
    key = jax.random.PRNGKey(0)
    k_in, k_par = jax.random.split(key)

    # Small synthetic config consistent with the constructor:
    #   width_list=[8,16,32,64], depth_list=[1,1,1,1], dim=16, expand_ratio=4
    width_list = [8, 16, 32, 64]
    depth_list = [1, 1, 1, 1]
    pg = PG(k_par)
    params = {
        "backbone": make_backbone(pg, width_list, depth_list, in_channels=3,
                                  dim=16, expand_ratio=4, act="hswish"),
        "head": make_dag_head(pg, c_final=width_list[-1], c_mid_in=width_list[-2],
                              hid=32, cout=8, act="hswish"),
    }

    x = jax.random.normal(k_in, (2, 3, 32, 32), jnp.float32)  # NCHW like PyTorch
    outputs = model_forward(x, params)
    jax.block_until_ready(outputs["stage_final"])
    jax.block_until_ready(outputs["segout"])
    # stage0: (2,8,16,16)  stage1: (2,16,8,8)  stage2: (2,32,4,4)
    # stage3/stage_final: (2,64,2,2)  segout (DAGBlock output): (2,8,4,4)
    print("KERNEL_OK")
</pallas_src>

<mosaic_0001>
module attributes {stable_mosaic.version = 11 : i64} {
  func.func @matmul_bias_act_kernel(%arg0: i32, %arg1: memref<512x27xbf16, #tpu.memory_space<vmem>>, %arg2: memref<27x8xbf16, #tpu.memory_space<vmem>>, %arg3: memref<1x8xf32, #tpu.memory_space<vmem>>, %arg4: memref<512x8xbf16, #tpu.memory_space<vmem>>) attributes {dimension_semantics = [#tpu.dimension_semantics<parallel>], iteration_bounds = array<i64: 1>, scalar_prefetch = 0 : i64, scratch_operands = 0 : i64, tpu.core_type = #tpu.core_type<tc>, window_params = [{transform_indices = @transform_0, window_bounds = array<i64: 512, 27>}, {pipeline_mode = #tpu.pipeline_mode<synchronous>, transform_indices = @transform_1, window_bounds = array<i64: 27, 8>}, {pipeline_mode = #tpu.pipeline_mode<synchronous>, transform_indices = @transform_2, window_bounds = array<i64: 1, 8>}, {transform_indices = @transform_3, window_bounds = array<i64: 512, 8>}]} {
    %c0 = arith.constant 0 : index
    %c0_0 = arith.constant 0 : index
    %0 = vector.load %arg1[%c0, %c0_0] : memref<512x27xbf16, #tpu.memory_space<vmem>>, vector<512x27xbf16>
    %c0_1 = arith.constant 0 : index
    %c0_2 = arith.constant 0 : index
    %1 = vector.load %arg2[%c0_1, %c0_2] : memref<27x8xbf16, #tpu.memory_space<vmem>>, vector<27x8xbf16>
    %cst = arith.constant dense<0.000000e+00> : vector<512x8xf32>
    %2 = tpu.matmul %0, %1, %cst {dimension_numbers = #tpu.dot_dimension_numbers<[1], [0], [0], [1], [0, 0, 1, 1], [], []>} : vector<512x27xbf16>, vector<27x8xbf16>, vector<512x8xf32> -> vector<512x8xf32>
    %c0_3 = arith.constant 0 : index
    %c0_4 = arith.constant 0 : index
    %3 = vector.load %arg3[%c0_3, %c0_4] : memref<1x8xf32, #tpu.memory_space<vmem>>, vector<1x8xf32>
    %4 = vector.broadcast %3 : vector<1x8xf32> to vector<512x8xf32>
    %5 = arith.addf %2, %4 : vector<512x8xf32>
    %cst_5 = arith.constant 3.000000e+00 : f32
    %6 = vector.broadcast %cst_5 : f32 to vector<512x8xf32>
    %7 = arith.addf %5, %6 : vector<512x8xf32>
    %cst_6 = arith.constant 0.000000e+00 : f32
    %cst_7 = arith.constant 6.000000e+00 : f32
    %8 = vector.broadcast %cst_6 : f32 to vector<512x8xf32>
    %9 = arith.maximumf %8, %7 : vector<512x8xf32>
    %10 = vector.broadcast %cst_7 : f32 to vector<512x8xf32>
    %11 = arith.minimumf %10, %9 : vector<512x8xf32>
    %12 = arith.mulf %5, %11 : vector<512x8xf32>
    %cst_8 = arith.constant 0.166666672 : f32
    %13 = vector.broadcast %cst_8 : f32 to vector<512x8xf32>
    %14 = arith.mulf %12, %13 : vector<512x8xf32>
    %15 = arith.truncf %14 : vector<512x8xf32> to vector<512x8xbf16>
    %c0_9 = arith.constant 0 : index
    %c0_10 = arith.constant 0 : index
    %16 = vector.load %arg4[%c0_9, %c0_10] : memref<512x8xbf16, #tpu.memory_space<vmem>>, vector<512x8xbf16>
    tpu.vector_store %arg4[%c0_9, %c0_10], %15 {strides = array<i32>} : memref<512x8xbf16, #tpu.memory_space<vmem>>, vector<512x8xbf16>,
    return
  }
  func.func @transform_0(%arg0: i32) -> (i32, i32) {
    %c0_i32 = arith.constant 0 : i32
    %c0_i32_0 = arith.constant 0 : i32
    return %arg0, %c0_i32 : i32, i32
  }
  func.func @transform_1(%arg0: i32) -> (i32, i32) {
    %c0_i32 = arith.constant 0 : i32
    %c0_i32_0 = arith.constant 0 : i32
    %c0_i32_1 = arith.constant 0 : i32
    return %c0_i32, %c0_i32_0 : i32, i32
  }
  func.func @transform_2(%arg0: i32) -> (i32, i32) {
    %c0_i32 = arith.constant 0 : i32
    %c0_i32_0 = arith.constant 0 : i32
    %c0_i32_1 = arith.constant 0 : i32
    return %c0_i32, %c0_i32_0 : i32, i32
  }
  func.func @transform_3(%arg0: i32) -> (i32, i32) {
    %c0_i32 = arith.constant 0 : i32
    %c0_i32_0 = arith.constant 0 : i32
    return %arg0, %c0_i32 : i32, i32
  }
}

</mosaic_0001>

<llo_original>
// kernel: tpu_custom_call.1
$region0: #{tpu_custom_call.1}
  #allocation0 [shape = 'u32[]', space=smem, size = 0x4, offset = 0x4, fixed_abs, tag = 'smem constant byte address 0x4 - core index']
  #allocation1 [shape = 'u32[144,128]{1,0:T(1,128)}', space=vmem, size = 0x12000, scoped, tag = 'internal scratch']
  %s0 = inlined_call_operand.vmem [shape: bf16[512,27], index: 0, kind: input, shape index: {}]
  %s1 = inlined_call_operand.vmem [shape: bf16[27,8], index: 1, kind: input, shape index: {}]
  %s2 = inlined_call_operand.vmem [shape: f32[1,8], index: 2, kind: input, shape index: {}]
  %s3 = inlined_call_operand.vmem [shape: bf16[512,8], index: 3, kind: output, shape index: {}]
  %s4 = sld [smem:[#allocation0]]
  $region22: #{tpu_custom_call.1} parent=0
    _
  %s6 = ssub.s32 1, %s4
  %s7 = scalar_select 0, %s6, %s4
  // Predicated region
  $region2: #{tpu_custom_call.1} parent=0 // pred_check
    _
  $region3: #{tpu_custom_call.1} parent=0 // pred_check_branch
    %9 = sbr.rel (0) target = $region5
  $region4: #{tpu_custom_call.1} parent=0 // pred_region
    _
  $region5: #{tpu_custom_call.1} parent=0 // pred_fallthru
    _
  // Predicated region
  $region6: #{tpu_custom_call.1} parent=0 // pred_check
    _
  $region7: #{tpu_custom_call.1} parent=0 // pred_check_branch
    %11 = sbr.rel (0) target = $region9
  $region8: #{tpu_custom_call.1} parent=0 // pred_region
    _
  $region9: #{tpu_custom_call.1} parent=0 // pred_fallthru
    _
  // Predicated region
  $region10: #{tpu_custom_call.1} parent=0 // pred_check
    _
  $region11: #{tpu_custom_call.1} parent=0 // pred_check_branch
    %13 = sbr.rel (0) target = $region13
  $region12: #{tpu_custom_call.1} parent=0 // pred_region
    _
  $region13: #{tpu_custom_call.1} parent=0 // pred_fallthru
    _
  %v15 = vld [vmem:[%s0] sm:$0xf]
  %v16 = vld [vmem:[%s0 + $0x4] sm:$0xf]
  %v17 = vld [vmem:[%s0 + $0x8] sm:$0xf]
  %v18 = vld [vmem:[%s0 + $0xc] sm:$0xf]
  %v19 = vld [vmem:[%s0 + $0x10] sm:$0xf]
  %v20 = vld [vmem:[%s0 + $0x14] sm:$0xf]
  %v21 = vld [vmem:[%s0 + $0x18] sm:$0xf]
  %v22 = vld [vmem:[%s0 + $0x1c] sm:$0xf]
  %v23 = vld [vmem:[%s0 + $0x20] sm:$0xf]
  %v24 = vld [vmem:[%s0 + $0x24] sm:$0xf]
  %v25 = vld [vmem:[%s0 + $0x28] sm:$0xf]
  %v26 = vld [vmem:[%s0 + $0x2c] sm:$0xf]
  %v27 = vld [vmem:[%s0 + $0x30] sm:$0xf]
  %v28 = vld [vmem:[%s0 + $0x34] sm:$0xf]
  %v29 = vld [vmem:[%s0 + $0x38] sm:$0xf]
  %v30 = vld [vmem:[%s0 + $0x3c] sm:$0xf]
  %v31 = vld [vmem:[%s0 + $0x40] sm:$0xf]
  %v32 = vld [vmem:[%s0 + $0x44] sm:$0xf]
  %v33 = vld [vmem:[%s0 + $0x48] sm:$0xf]
  %v34 = vld [vmem:[%s0 + $0x4c] sm:$0xf]
  %v35 = vld [vmem:[%s0 + $0x50] sm:$0xf]
  %v36 = vld [vmem:[%s0 + $0x54] sm:$0xf]
  %v37 = vld [vmem:[%s0 + $0x58] sm:$0xf]
  %v38 = vld [vmem:[%s0 + $0x5c] sm:$0xf]
  %v39 = vld [vmem:[%s0 + $0x60] sm:$0xf]
  %v40 = vld [vmem:[%s0 + $0x64] sm:$0xf]
  %v41 = vld [vmem:[%s0 + $0x68] sm:$0xf]
  %v42 = vld [vmem:[%s0 + $0x6c] sm:$0xf]
  %v43 = vld [vmem:[%s0 + $0x70] sm:$0xf]
  %v44 = vld [vmem:[%s0 + $0x74] sm:$0xf]
  %v45 = vld [vmem:[%s0 + $0x78] sm:$0xf]
  %v46 = vld [vmem:[%s0 + $0x7c] sm:$0xf]
  %v47 = vld [vmem:[%s0 + $0x80] sm:$0xf]
  %v48 = vld [vmem:[%s0 + $0x84] sm:$0xf]
  %v49 = vld [vmem:[%s0 + $0x88] sm:$0xf]
  %v50 = vld [vmem:[%s0 + $0x8c] sm:$0xf]
  %v51 = vld [vmem:[%s0 + $0x90] sm:$0xf]
  %v52 = vld [vmem:[%s0 + $0x94] sm:$0xf]
  %v53 = vld [vmem:[%s0 + $0x98] sm:$0xf]
  %v54 = vld [vmem:[%s0 + $0x9c] sm:$0xf]
  %v55 = vld [vmem:[%s0 + $0xa0] sm:$0xf]
  %v56 = vld [vmem:[%s0 + $0xa4] sm:$0xf]
  %v57 = vld [vmem:[%s0 + $0xa8] sm:$0xf]
  %v58 = vld [vmem:[%s0 + $0xac] sm:$0xf]
  %v59 = vld [vmem:[%s0 + $0xb0] sm:$0xf]
  %v60 = vld [vmem:[%s0 + $0xb4] sm:$0xf]
  %v61 = vld [vmem:[%s0 + $0xb8] sm:$0xf]
  %v62 = vld [vmem:[%s0 + $0xbc] sm:$0xf]
  %v63 = vld [vmem:[%s0 + $0xc0] sm:$0xf]
  %v64 = vld [vmem:[%s0 + $0xc4] sm:$0xf]
  %v65 = vld [vmem:[%s0 + $0xc8] sm:$0xf]
  %v66 = vld [vmem:[%s0 + $0xcc] sm:$0xf]
  %v67 = vld [vmem:[%s0 + $0xd0] sm:$0xf]
  %v68 = vld [vmem:[%s0 + $0xd4] sm:$0xf]
  %v69 = vld [vmem:[%s0 + $0xd8] sm:$0xf]
  %v70 = vld [vmem:[%s0 + $0xdc] sm:$0xf]
  %v71 = vld [vmem:[%s0 + $0xe0] sm:$0xf]
  %v72 = vld [vmem:[%s0 + $0xe4] sm:$0xf]
  %v73 = vld [vmem:[%s0 + $0xe8] sm:$0xf]
  %v74 = vld [vmem:[%s0 + $0xec] sm:$0xf]
  %v75 = vld [vmem:[%s0 + $0xf0] sm:$0xf]
  %v76 = vld [vmem:[%s0 + $0xf4] sm:$0xf]
  %v77 = vld [vmem:[%s0 + $0xf8] sm:$0xf]
  %v78 = vld [vmem:[%s0 + $0xfc] sm:$0xf]
  %v79 = vld [vmem:[%s1] sm:$0xf]
  %v80 = vld [vmem:[%s1 + $0x4] sm:$0xf]
  %v81 = vld [vmem:[%s1 + $0x8] sm:$0xf]
  %v82 = vld [vmem:[%s1 + $0xc] sm:$0x3]
  %v83 = vld [vmem:[%s2] sm:$0x1]
  %v85 = vlaneseq
  %v86 = vshrl.u32 %v85, 7
  %v87 = vsub.s32 0, %v86
  %v88 = vrot.slane %v83, %v87
  %v154 = vunpack.c.l.b16 %v15
  %v155 = vunpack.c.l.b16 %v16
  %v156 = vunpack.c.l.b16 %v17
  %v157 = vunpack.c.l.b16 %v18
  %v158 = vunpack.c.l.b16 %v19
  %v159 = vunpack.c.l.b16 %v20
  %v160 = vunpack.c.l.b16 %v21
  %v161 = vunpack.c.l.b16 %v22
  %v162 = vunpack.c.l.b16 %v23
  %v163 = vunpack.c.l.b16 %v24
  %v164 = vunpack.c.l.b16 %v25
  %v165 = vunpack.c.l.b16 %v26
  %v166 = vunpack.c.l.b16 %v27
  %v167 = vunpack.c.l.b16 %v28
  %v168 = vunpack.c.l.b16 %v29
  %v169 = vunpack.c.l.b16 %v30
  %v170 = vunpack.c.l.b16 %v31
  %v171 = vunpack.c.l.b16 %v32
  %v172 = vunpack.c.l.b16 %v33
  %v173 = vunpack.c.l.b16 %v34
  %v174 = vunpack.c.l.b16 %v35
  %v175 = vunpack.c.l.b16 %v36
  %v176 = vunpack.c.l.b16 %v37
  %v177 = vunpack.c.l.b16 %v38
  %v178 = vunpack.c.l.b16 %v39
  %v179 = vunpack.c.l.b16 %v40
  %v180 = vunpack.c.l.b16 %v41
  %v181 = vunpack.c.l.b16 %v42
  %v182 = vunpack.c.l.b16 %v43
  %v183 = vunpack.c.l.b16 %v44
  %v184 = vunpack.c.l.b16 %v45
  %v185 = vunpack.c.l.b16 %v46
  %v186 = vunpack.c.l.b16 %v47
  %v187 = vunpack.c.l.b16 %v48
  %v188 = vunpack.c.l.b16 %v49
  %v189 = vunpack.c.l.b16 %v50
  %v190 = vunpack.c.l.b16 %v51
  %v191 = vunpack.c.l.b16 %v52
  %v192 = vunpack.c.l.b16 %v53
  %v193 = vunpack.c.l.b16 %v54
  %v194 = vunpack.c.l.b16 %v55
  %v195 = vunpack.c.l.b16 %v56
  %v196 = vunpack.c.l.b16 %v57
  %v197 = vunpack.c.l.b16 %v58
  %v198 = vunpack.c.l.b16 %v59
  %v199 = vunpack.c.l.b16 %v60
  %v200 = vunpack.c.l.b16 %v61
  %v201 = vunpack.c.l.b16 %v62
  %v202 = vunpack.c.l.b16 %v63
  %v203 = vunpack.c.l.b16 %v64
  %v204 = vunpack.c.l.b16 %v65
  %v205 = vunpack.c.l.b16 %v66
  %v206 = vunpack.c.l.b16 %v67
  %v207 = vunpack.c.l.b16 %v68
  %v208 = vunpack.c.l.b16 %v69
  %v209 = vunpack.c.l.b16 %v70
  %v210 = vunpack.c.l.b16 %v71
  %v211 = vunpack.c.l.b16 %v72
  %v212 = vunpack.c.l.b16 %v73
  %v213 = vunpack.c.l.b16 %v74
  %v214 = vunpack.c.l.b16 %v75
  %v215 = vunpack.c.l.b16 %v76
  %v216 = vunpack.c.l.b16 %v77
  %v217 = vunpack.c.l.b16 %v78
  %v218 = vpack.c.b16 %v155, %v154
  %v219 = vpack.c.b16 %v157, %v156
  %v220 = vpack.c.b16 %v159, %v158
  %v221 = vpack.c.b16 %v161, %v160
  %v222 = vpack.c.b16 %v163, %v162
  %v223 = vpack.c.b16 %v165, %v164
  %v224 = vpack.c.b16 %v167, %v166
  %v225 = vpack.c.b16 %v169, %v168
  %v226 = vpack.c.b16 %v171, %v170
  %v227 = vpack.c.b16 %v173, %v172
  %v228 = vpack.c.b16 %v175, %v174
  %v229 = vpack.c.b16 %v177, %v176
  %v230 = vpack.c.b16 %v179, %v178
  %v231 = vpack.c.b16 %v181, %v180
  %v232 = vpack.c.b16 %v183, %v182
  %v233 = vpack.c.b16 %v185, %v184
  %v234 = vpack.c.b16 %v187, %v186
  %v235 = vpack.c.b16 %v189, %v188
  %v236 = vpack.c.b16 %v191, %v190
  %v237 = vpack.c.b16 %v193, %v192
  %v238 = vpack.c.b16 %v195, %v194
  %v239 = vpack.c.b16 %v197, %v196
  %v240 = vpack.c.b16 %v199, %v198
  %v241 = vpack.c.b16 %v201, %v200
  %v242 = vpack.c.b16 %v203, %v202
  %v243 = vpack.c.b16 %v205, %v204
  %v244 = vpack.c.b16 %v207, %v206
  %v245 = vpack.c.b16 %v209, %v208
  %v246 = vpack.c.b16 %v211, %v210
  %v247 = vpack.c.b16 %v213, %v212
  %v248 = vpack.c.b16 %v215, %v214
  %v249 = vpack.c.b16 %v217, %v216
  %v254 = vunpack.c.l.b16 %v79
  %v255 = vunpack.c.l.b16 %v80
  %v256 = vunpack.c.l.b16 %v81
  %v257 = vunpack.c.l.b16 %v82
  %v258 = vpack.c.b16 %v255, %v254
  %v259 = vpack.c.b16 %v257, %v256
  %vm261 = vcmask 220160
  %v263 = vsel %vm261, %v218, 0
  %v266 = vsel %vm261, %v219, 0
  %v269 = vsel %vm261, %v220, 0
  %v272 = vsel %vm261, %v221, 0
  %v275 = vsel %vm261, %v222, 0
  %v278 = vsel %vm261, %v223, 0
  %v281 = vsel %vm261, %v224, 0
  %v284 = vsel %vm261, %v225, 0
  %v287 = vsel %vm261, %v226, 0
  %v290 = vsel %vm261, %v227, 0
  %v293 = vsel %vm261, %v228, 0
  %v296 = vsel %vm261, %v229, 0
  %v299 = vsel %vm261, %v230, 0
  %v302 = vsel %vm261, %v231, 0
  %v305 = vsel %vm261, %v232, 0
  %v308 = vsel %vm261, %v233, 0
  %v311 = vsel %vm261, %v234, 0
  %v314 = vsel %vm261, %v235, 0
  %v317 = vsel %vm261, %v236, 0
  %v320 = vsel %vm261, %v237, 0
  %v323 = vsel %vm261, %v238, 0
  %v326 = vsel %vm261, %v239, 0
  %v329 = vsel %vm261, %v240, 0
  %v332 = vsel %vm261, %v241, 0
  %v335 = vsel %vm261, %v242, 0
  %v338 = vsel %vm261, %v243, 0
  %v341 = vsel %vm261, %v244, 0
  %v344 = vsel %vm261, %v245, 0
  %v347 = vsel %vm261, %v246, 0
  %v350 = vsel %vm261, %v247, 0
  %v353 = vsel %vm261, %v248, 0
  %v356 = vsel %vm261, %v249, 0
  %vm358 = vcmask 1044480
  %vm359 = vcmask 1045504
  %v360 = vsel %vm358, 4294967295, 65535
  %v361 = vsel %vm359, %v360, 0
  %v363 = vand.u32 %v259, %v361
  %365 = vmatprep.subr.bf16.mxu0 0
  %366 = vmatpush1.bf16.msra.mxu0 %v258
  %367 = vmatprep.subr.bf16.mxu0 0
  %368 = vmatpush1.bf16.msra.mxu0 %v363
  %369 = vmatprep.subr.bf16.mxu0 0
  %370 = vmatpush1.bf16.msra.mxu0 0
  %371 = vmatprep.subr.bf16.mxu0 0
  %372 = vmatpush1.bf16.msra.mxu0 0
  %373 = vmatprep.subr.bf16.mxu0 0
  %374 = vmatpush1.bf16.msra.mxu0 0
  %375 = vmatprep.subr.bf16.mxu0 0
  %376 = vmatpush1.bf16.msra.mxu0 0
  %377 = vmatprep.subr.bf16.mxu0 0
  %378 = vmatpush1.bf16.msra.mxu0 0
  %379 = vmatprep.subr.bf16.mxu0 0
  %380 = vmatpush1.bf16.msra.mxu0 0
  %381 = vmatprep.subr.bf16.mxu0 0
  %382 = vmatpush1.bf16.msra.mxu0 0
  %383 = vmatprep.subr.bf16.mxu0 0
  %384 = vmatpush1.bf16.msra.mxu0 0
  %385 = vmatprep.subr.bf16.mxu0 0
  %386 = vmatpush1.bf16.msra.mxu0 0
  %387 = vmatprep.subr.bf16.mxu0 0
  %388 = vmatpush1.bf16.msra.mxu0 0
  %389 = vmatprep.subr.bf16.mxu0 0
  %390 = vmatpush1.bf16.msra.mxu0 0
  %391 = vmatprep.subr.bf16.mxu0 0
  %392 = vmatpush1.bf16.msra.mxu0 0
  %393 = vmatprep.subr.bf16.mxu0 0
  %394 = vmatpush1.bf16.msra.mxu0 0
  %395 = vmatprep.subr.bf16.mxu0 0
  %396 = vmatpush1.bf16.msra.mxu0 0
  %397 = vmatprep.mubr.bf16.mxu0 0
  %398 = vmatmul.mubr.bf16.gmra.mrb[0].mxu0 %v263
  %v399 = vpop.f32.mrb[0].mxu0
  %v400 = vadd.f32 %v88, %v399
  %v401 = vpop.f32.mrb[0].mxu0
  %v402 = vpop.f32.mrb[0].mxu0
  %v403 = vadd.f32 %v88, %v402
  %v404 = vpop.f32.mrb[0].mxu0
  %405 = vmatprep.mubr.bf16.mxu0 0
  %406 = vmatmul.mubr.bf16.gmra.mrb[0].mxu0 %v266
  %v407 = vpop.f32.mrb[0].mxu0
  %v408 = vadd.f32 %v88, %v407
  %v409 = vpop.f32.mrb[0].mxu0
  %v410 = vpop.f32.mrb[0].mxu0
  %v411 = vadd.f32 %v88, %v410
  %v412 = vpop.f32.mrb[0].mxu0
  %413 = vmatprep.mubr.bf16.mxu0 0
  %414 = vmatmul.mubr.bf16.gmra.mrb[0].mxu0 %v269
  %v415 = vpop.f32.mrb[0].mxu0
  %v416 = vadd.f32 %v88, %v415
  %v417 = vpop.f32.mrb[0].mxu0
  %v418 = vpop.f32.mrb[0].mxu0
  %v419 = vadd.f32 %v88, %v418
  %v420 = vpop.f32.mrb[0].mxu0
  %421 = vmatprep.mubr.bf16.mxu0 0
  %422 = vmatmul.mubr.bf16.gmra.mrb[0].mxu0 %v272
  %v423 = vpop.f32.mrb[0].mxu0
  %v424 = vadd.f32 %v88, %v423
  %v425 = vpop.f32.mrb[0].mxu0
  %v426 = vpop.f32.mrb[0].mxu0
  %v427 = vadd.f32 %v88, %v426
  %v428 = vpop.f32.mrb[0].mxu0
  %429 = vmatprep.mubr.bf16.mxu0 0
  %430 = vmatmul.mubr.bf16.gmra.mrb[0].mxu0 %v275
  %v431 = vpop.f32.mrb[0].mxu0
  %v432 = vadd.f32 %v88, %v431
  %v433 = vpop.f32.mrb[0].mxu0
  %v434 = vpop.f32.mrb[0].mxu0
  %v435 = vadd.f32 %v88, %v434
  %v436 = vpop.f32.mrb[0].mxu0
  %437 = vmatprep.mubr.bf16.mxu0 0
  %438 = vmatmul.mubr.bf16.gmra.mrb[0].mxu0 %v278
  %v439 = vpop.f32.mrb[0].mxu0
  %v440 = vadd.f32 %v88, %v439
  %v441 = vpop.f32.mrb[0].mxu0
  %v442 = vpop.f32.mrb[0].mxu0
  %v443 = vadd.f32 %v88, %v442
  %v444 = vpop.f32.mrb[0].mxu0
  %445 = vmatprep.mubr.bf16.mxu0 0
  %446 = vmatmul.mubr.bf16.gmra.mrb[0].mxu0 %v281
  %v447 = vpop.f32.mrb[0].mxu0
  %v448 = vadd.f32 %v88, %v447
  %v449 = vpop.f32.mrb[0].mxu0
  %v450 = vpop.f32.mrb[0].mxu0
  %v451 = vadd.f32 %v88, %v450
  %v452 = vpop.f32.mrb[0].mxu0
  %453 = vmatprep.mubr.bf16.mxu0 0
  %454 = vmatmul.mubr.bf16.gmra.mrb[0].mxu0 %v284
  %v455 = vpop.f32.mrb[0].mxu0
  %v456 = vadd.f32 %v88, %v455
  %v457 = vpop.f32.mrb[0].mxu0
  %v458 = vpop.f32.mrb[0].mxu0
  %v459 = vadd.f32 %v88, %v458
  %v460 = vpop.f32.mrb[0].mxu0
  %461 = vmatprep.mubr.bf16.mxu0 0
  %462 = vmatmul.mubr.bf16.gmra.mrb[0].mxu0 %v287
  %v463 = vpop.f32.mrb[0].mxu0
  %v464 = vadd.f32 %v88, %v463
  %v465 = vpop.f32.mrb[0].mxu0
  %v466 = vpop.f32.mrb[0].mxu0
  %v467 = vadd.f32 %v88, %v466
  %v468 = vpop.f32.mrb[0].mxu0
  %469 = vmatprep.mubr.bf16.mxu0 0
  %470 = vmatmul.mubr.bf16.gmra.mrb[0].mxu0 %v290
  %v471 = vpop.f32.mrb[0].mxu0
  %v472 = vadd.f32 %v88, %v471
  %v473 = vpop.f32.mrb[0].mxu0
  %v474 = vpop.f32.mrb[0].mxu0
  %v475 = vadd.f32 %v88, %v474
  %v476 = vpop.f32.mrb[0].mxu0
  %477 = vmatprep.mubr.bf16.mxu0 0
  %478 = vmatmul.mubr.bf16.gmra.mrb[0].mxu0 %v293
  %v479 = vpop.f32.mrb[0].mxu0
  %v480 = vadd.f32 %v88, %v479
  %v481 = vpop.f32.mrb[0].mxu0
  %v482 = vpop.f32.mrb[0].mxu0
  %v483 = vadd.f32 %v88, %v482
  %v484 = vpop.f32.mrb[0].mxu0
  %485 = vmatprep.mubr.bf16.mxu0 0
  %486 = vmatmul.mubr.bf16.gmra.mrb[0].mxu0 %v296
  %v487 = vpop.f32.mrb[0].mxu0
  %v488 = vadd.f32 %v88, %v487
  %v489 = vpop.f32.mrb[0].mxu0
  %v490 = vpop.f32.mrb[0].mxu0
  %v491 = vadd.f32 %v88, %v490
  %v492 = vpop.f32.mrb[0].mxu0
  %493 = vmatprep.mubr.bf16.mxu0 0
  %494 = vmatmul.mubr.bf16.gmra.mrb[0].mxu0 %v299
  %v495 = vpop.f32.mrb[0].mxu0
  %v496 = vadd.f32 %v88, %v495
  %v497 = vpop.f32.mrb[0].mxu0
  %v498 = vpop.f32.mrb[0].mxu0
  %v499 = vadd.f32 %v88, %v498
  %v500 = vpop.f32.mrb[0].mxu0
  %501 = vmatprep.mubr.bf16.mxu0 0
  %502 = vmatmul.mubr.bf16.gmra.mrb[0].mxu0 %v302
  %v503 = vpop.f32.mrb[0].mxu0
  %v504 = vadd.f32 %v88, %v503
  %v505 = vpop.f32.mrb[0].mxu0
  %v506 = vpop.f32.mrb[0].mxu0
  %v507 = vadd.f32 %v88, %v506
  %v508 = vpop.f32.mrb[0].mxu0
  %509 = vmatprep.mubr.bf16.mxu0 0
  %510 = vmatmul.mubr.bf16.gmra.mrb[0].mxu0 %v305
  %v511 = vpop.f32.mrb[0].mxu0
  %v512 = vadd.f32 %v88, %v511
  %v513 = vpop.f32.mrb[0].mxu0
  %v514 = vpop.f32.mrb[0].mxu0
  %v515 = vadd.f32 %v88, %v514
  %v516 = vpop.f32.mrb[0].mxu0
  %517 = vmatprep.mubr.bf16.mxu0 0
  %518 = vmatmul.mubr.bf16.gmra.mrb[0].mxu0 %v308
  %v519 = vpop.f32.mrb[0].mxu0
  %v520 = vadd.f32 %v88, %v519
  %v521 = vpop.f32.mrb[0].mxu0
  %v522 = vpop.f32.mrb[0].mxu0
  %v523 = vadd.f32 %v88, %v522
  %v524 = vpop.f32.mrb[0].mxu0
  %525 = vmatprep.mubr.bf16.mxu0 0
  %526 = vmatmul.mubr.bf16.gmra.mrb[0].mxu0 %v311
  %v527 = vpop.f32.mrb[0].mxu0
  %v528 = vadd.f32 %v88, %v527
  %v529 = vpop.f32.mrb[0].mxu0
  %v530 = vpop.f32.mrb[0].mxu0
  %v531 = vadd.f32 %v88, %v530
  %v532 = vpop.f32.mrb[0].mxu0
  %533 = vmatprep.mubr.bf16.mxu0 0
  %534 = vmatmul.mubr.bf16.gmra.mrb[0].mxu0 %v314
  %v535 = vpop.f32.mrb[0].mxu0
  %v536 = vadd.f32 %v88, %v535
  %v537 = vpop.f32.mrb[0].mxu0
  %v538 = vpop.f32.mrb[0].mxu0
  %v539 = vadd.f32 %v88, %v538
  %v540 = vpop.f32.mrb[0].mxu0
  %541 = vmatprep.mubr.bf16.mxu0 0
  %542 = vmatmul.mubr.bf16.gmra.mrb[0].mxu0 %v317
  %v543 = vpop.f32.mrb[0].mxu0
  %v544 = vadd.f32 %v88, %v543
  %v545 = vpop.f32.mrb[0].mxu0
  %v546 = vpop.f32.mrb[0].mxu0
  %v547 = vadd.f32 %v88, %v546
  %v548 = vpop.f32.mrb[0].mxu0
  %549 = vmatprep.mubr.bf16.mxu0 0
  %550 = vmatmul.mubr.bf16.gmra.mrb[0].mxu0 %v320
  %v551 = vpop.f32.mrb[0].mxu0
  %v552 = vadd.f32 %v88, %v551
  %v553 = vpop.f32.mrb[0].mxu0
  %v554 = vpop.f32.mrb[0].mxu0
  %v555 = vadd.f32 %v88, %v554
  %v556 = vpop.f32.mrb[0].mxu0
  %557 = vmatprep.mubr.bf16.mxu0 0
  %558 = vmatmul.mubr.bf16.gmra.mrb[0].mxu0 %v323
  %v559 = vpop.f32.mrb[0].mxu0
  %v560 = vadd.f32 %v88, %v559
  %v561 = vpop.f32.mrb[0].mxu0
  %v562 = vpop.f32.mrb[0].mxu0
  %v563 = vadd.f32 %v88, %v562
  %v564 = vpop.f32.mrb[0].mxu0
  %565 = vmatprep.mubr.bf16.mxu0 0
  %566 = vmatmul.mubr.bf16.gmra.mrb[0].mxu0 %v326
  %v567 = vpop.f32.mrb[0].mxu0
  %v568 = vadd.f32 %v88, %v567
  %v569 = vpop.f32.mrb[0].mxu0
  %v570 = vpop.f32.mrb[0].mxu0
  %v571 = vadd.f32 %v88, %v570
  %v572 = vpop.f32.mrb[0].mxu0
  %573 = vmatprep.mubr.bf16.mxu0 0
  %574 = vmatmul.mubr.bf16.gmra.mrb[0].mxu0 %v329
  %v575 = vpop.f32.mrb[0].mxu0
  %v576 = vadd.f32 %v88, %v575
  %v577 = vpop.f32.mrb[0].mxu0
  %v578 = vpop.f32.mrb[0].mxu0
  %v579 = vadd.f32 %v88, %v578
  %v580 = vpop.f32.mrb[0].mxu0
  %581 = vmatprep.mubr.bf16.mxu0 0
  %582 = vmatmul.mubr.bf16.gmra.mrb[0].mxu0 %v332
  %v583 = vpop.f32.mrb[0].mxu0
  %v584 = vadd.f32 %v88, %v583
  %v585 = vpop.f32.mrb[0].mxu0
  %v586 = vpop.f32.mrb[0].mxu0
  %v587 = vadd.f32 %v88, %v586
  %v588 = vpop.f32.mrb[0].mxu0
  %589 = vmatprep.mubr.bf16.mxu0 0
  %590 = vmatmul.mubr.bf16.gmra.mrb[0].mxu0 %v335
  %v591 = vpop.f32.mrb[0].mxu0
  %v592 = vadd.f32 %v88, %v591
  %v593 = vpop.f32.mrb[0].mxu0
  %v594 = vpop.f32.mrb[0].mxu0
  %v595 = vadd.f32 %v88, %v594
  %v596 = vpop.f32.mrb[0].mxu0
  %597 = vmatprep.mubr.bf16.mxu0 0
  %598 = vmatmul.mubr.bf16.gmra.mrb[0].mxu0 %v338
  %v599 = vpop.f32.mrb[0].mxu0
  %v600 = vadd.f32 %v88, %v599
  %v601 = vpop.f32.mrb[0].mxu0
  %v602 = vpop.f32.mrb[0].mxu0
  %v603 = vadd.f32 %v88, %v602
  %v604 = vpop.f32.mrb[0].mxu0
  %605 = vmatprep.mubr.bf16.mxu0 0
  %606 = vmatmul.mubr.bf16.gmra.mrb[0].mxu0 %v341
  %v607 = vpop.f32.mrb[0].mxu0
  %v608 = vadd.f32 %v88, %v607
  %v609 = vpop.f32.mrb[0].mxu0
  %v610 = vpop.f32.mrb[0].mxu0
  %v611 = vadd.f32 %v88, %v610
  %v612 = vpop.f32.mrb[0].mxu0
  %613 = vmatprep.mubr.bf16.mxu0 0
  %614 = vmatmul.mubr.bf16.gmra.mrb[0].mxu0 %v344
  %v615 = vpop.f32.mrb[0].mxu0
  %v616 = vadd.f32 %v88, %v615
  %v617 = vpop.f32.mrb[0].mxu0
  %v618 = vpop.f32.mrb[0].mxu0
  %v619 = vadd.f32 %v88, %v618
  %v620 = vpop.f32.mrb[0].mxu0
  %621 = vmatprep.mubr.bf16.mxu0 0
  %622 = vmatmul.mubr.bf16.gmra.mrb[0].mxu0 %v347
  %v623 = vpop.f32.mrb[0].mxu0
  %v624 = vadd.f32 %v88, %v623
  %v625 = vpop.f32.mrb[0].mxu0
  %v626 = vpop.f32.mrb[0].mxu0
  %v627 = vadd.f32 %v88, %v626
  %v628 = vpop.f32.mrb[0].mxu0
  %629 = vmatprep.mubr.bf16.mxu0 0
  %630 = vmatmul.mubr.bf16.gmra.mrb[0].mxu0 %v350
  %v631 = vpop.f32.mrb[0].mxu0
  %v632 = vadd.f32 %v88, %v631
  %v633 = vpop.f32.mrb[0].mxu0
  %v634 = vpop.f32.mrb[0].mxu0
  %v635 = vadd.f32 %v88, %v634
  %v636 = vpop.f32.mrb[0].mxu0
  %637 = vmatprep.mubr.bf16.mxu0 0
  %638 = vmatmul.mubr.bf16.gmra.mrb[0].mxu0 %v353
  %v639 = vpop.f32.mrb[0].mxu0
  %v640 = vadd.f32 %v88, %v639
  %v641 = vpop.f32.mrb[0].mxu0
  %v642 = vpop.f32.mrb[0].mxu0
  %v643 = vadd.f32 %v88, %v642
  %v644 = vpop.f32.mrb[0].mxu0
  %645 = vmatprep.mubr.bf16.mxu0 0
  %646 = vmatmul.mubr.bf16.gmra.mrb[0].mxu0 %v356
  %v647 = vpop.f32.mrb[0].mxu0
  %v648 = vadd.f32 %v88, %v647
  %v649 = vpop.f32.mrb[0].mxu0
  %v650 = vpop.f32.mrb[0].mxu0
  %v651 = vadd.f32 %v88, %v650
  %v652 = vpop.f32.mrb[0].mxu0
  %653 = vdwg.mxu0
  %v654 = vadd.f32 %v400, 3.0
  %v655 = vadd.f32 %v403, 3.0
  %v656 = vadd.f32 %v408, 3.0
  %v657 = vadd.f32 %v411, 3.0
  %v658 = vadd.f32 %v416, 3.0
  %v659 = vadd.f32 %v419, 3.0
  %v660 = vadd.f32 %v424, 3.0
  %v661 = vadd.f32 %v427, 3.0
  %v662 = vadd.f32 %v432, 3.0
  %v663 = vadd.f32 %v435, 3.0
  %v664 = vadd.f32 %v440, 3.0
  %v665 = vadd.f32 %v443, 3.0
  %v666 = vadd.f32 %v448, 3.0
  %v667 = vadd.f32 %v451, 3.0
  %v668 = vadd.f32 %v456, 3.0
  %v669 = vadd.f32 %v459, 3.0
  %v670 = vadd.f32 %v464, 3.0
  %v671 = vadd.f32 %v467, 3.0
  %v672 = vadd.f32 %v472, 3.0
  %v673 = vadd.f32 %v475, 3.0
  %v674 = vadd.f32 %v480, 3.0
  %v675 = vadd.f32 %v483, 3.0
  %v676 = vadd.f32 %v488, 3.0
  %v677 = vadd.f32 %v491, 3.0
  %v678 = vadd.f32 %v496, 3.0
  %v679 = vadd.f32 %v499, 3.0
  %v680 = vadd.f32 %v504, 3.0
  %v681 = vadd.f32 %v507, 3.0
  %v682 = vadd.f32 %v512, 3.0
  %v683 = vadd.f32 %v515, 3.0
  %v684 = vadd.f32 %v520, 3.0
  %v685 = vadd.f32 %v523, 3.0
  %v686 = vadd.f32 %v528, 3.0
  %v687 = vadd.f32 %v531, 3.0
  %v688 = vadd.f32 %v536, 3.0
  %v689 = vadd.f32 %v539, 3.0
  %v690 = vadd.f32 %v544, 3.0
  %v691 = vadd.f32 %v547, 3.0
  %v692 = vadd.f32 %v552, 3.0
  %v693 = vadd.f32 %v555, 3.0
  %v694 = vadd.f32 %v560, 3.0
  %v695 = vadd.f32 %v563, 3.0
  %v696 = vadd.f32 %v568, 3.0
  %v697 = vadd.f32 %v571, 3.0
  %v698 = vadd.f32 %v576, 3.0
  %v699 = vadd.f32 %v579, 3.0
  %v700 = vadd.f32 %v584, 3.0
  %v701 = vadd.f32 %v587, 3.0
  %v702 = vadd.f32 %v592, 3.0
  %v703 = vadd.f32 %v595, 3.0
  %v704 = vadd.f32 %v600, 3.0
  %v705 = vadd.f32 %v603, 3.0
  %v706 = vadd.f32 %v608, 3.0
  %v707 = vadd.f32 %v611, 3.0
  %v708 = vadd.f32 %v616, 3.0
  %v709 = vadd.f32 %v619, 3.0
  %v710 = vadd.f32 %v624, 3.0
  %v711 = vadd.f32 %v627, 3.0
  %v712 = vadd.f32 %v632, 3.0
  %v713 = vadd.f32 %v635, 3.0
  %v714 = vadd.f32 %v640, 3.0
  %v715 = vadd.f32 %v643, 3.0
  %v716 = vadd.f32 %v648, 3.0
  %v717 = vadd.f32 %v651, 3.0
  %v718 = vmax.f32 %v654, 0.0
  %v719 = vmax.f32 %v655, 0.0
  %v720 = vmax.f32 %v656, 0.0
  %v721 = vmax.f32 %v657, 0.0
  %v722 = vmax.f32 %v658, 0.0
  %v723 = vmax.f32 %v659, 0.0
  %v724 = vmax.f32 %v660, 0.0
  %v725 = vmax.f32 %v661, 0.0
  %v726 = vmax.f32 %v662, 0.0
  %v727 = vmax.f32 %v663, 0.0
  %v728 = vmax.f32 %v664, 0.0
  %v729 = vmax.f32 %v665, 0.0
  %v730 = vmax.f32 %v666, 0.0
  %v731 = vmax.f32 %v667, 0.0
  %v732 = vmax.f32 %v668, 0.0
  %v733 = vmax.f32 %v669, 0.0
  %v734 = vmax.f32 %v670, 0.0
  %v735 = vmax.f32 %v671, 0.0
  %v736 = vmax.f32 %v672, 0.0
  %v737 = vmax.f32 %v673, 0.0
  %v738 = vmax.f32 %v674, 0.0
  %v739 = vmax.f32 %v675, 0.0
  %v740 = vmax.f32 %v676, 0.0
  %v741 = vmax.f32 %v677, 0.0
  %v742 = vmax.f32 %v678, 0.0
  %v743 = vmax.f32 %v679, 0.0
  %v744 = vmax.f32 %v680, 0.0
  %v745 = vmax.f32 %v681, 0.0
  %v746 = vmax.f32 %v682, 0.0
  %v747 = vmax.f32 %v683, 0.0
  %v748 = vmax.f32 %v684, 0.0
  %v749 = vmax.f32 %v685, 0.0
  %v750 = vmax.f32 %v686, 0.0
  %v751 = vmax.f32 %v687, 0.0
  %v752 = vmax.f32 %v688, 0.0
  %v753 = vmax.f32 %v689, 0.0
  %v754 = vmax.f32 %v690, 0.0
  %v755 = vmax.f32 %v691, 0.0
  %v756 = vmax.f32 %v692, 0.0
  %v757 = vmax.f32 %v693, 0.0
  %v758 = vmax.f32 %v694, 0.0
  %v759 = vmax.f32 %v695, 0.0
  %v760 = vmax.f32 %v696, 0.0
  %v761 = vmax.f32 %v697, 0.0
  %v762 = vmax.f32 %v698, 0.0
  %v763 = vmax.f32 %v699, 0.0
  %v764 = vmax.f32 %v700, 0.0
  %v765 = vmax.f32 %v701, 0.0
  %v766 = vmax.f32 %v702, 0.0
  %v767 = vmax.f32 %v703, 0.0
  %v768 = vmax.f32 %v704, 0.0
  %v769 = vmax.f32 %v705, 0.0
  %v770 = vmax.f32 %v706, 0.0
  %v771 = vmax.f32 %v707, 0.0
  %v772 = vmax.f32 %v708, 0.0
  %v773 = vmax.f32 %v709, 0.0
  %v774 = vmax.f32 %v710, 0.0
  %v775 = vmax.f32 %v711, 0.0
  %v776 = vmax.f32 %v712, 0.0
  %v777 = vmax.f32 %v713, 0.0
  %v778 = vmax.f32 %v714, 0.0
  %v779 = vmax.f32 %v715, 0.0
  %v780 = vmax.f32 %v716, 0.0
  %v781 = vmax.f32 %v717, 0.0
  %v782 = vmin.f32 %v718, 6.0
  %v783 = vmin.f32 %v719, 6.0
  %v784 = vmin.f32 %v720, 6.0
  %v785 = vmin.f32 %v721, 6.0
  %v786 = vmin.f32 %v722, 6.0
  %v787 = vmin.f32 %v723, 6.0
  %v788 = vmin.f32 %v724, 6.0
  %v789 = vmin.f32 %v725, 6.0
  %v790 = vmin.f32 %v726, 6.0
  %v791 = vmin.f32 %v727, 6.0
  %v792 = vmin.f32 %v728, 6.0
  %v793 = vmin.f32 %v729, 6.0
  %v794 = vmin.f32 %v730, 6.0
  %v795 = vmin.f32 %v731, 6.0
  %v796 = vmin.f32 %v732, 6.0
  %v797 = vmin.f32 %v733, 6.0
  %v798 = vmin.f32 %v734, 6.0
  %v799 = vmin.f32 %v735, 6.0
  %v800 = vmin.f32 %v736, 6.0
  %v801 = vmin.f32 %v737, 6.0
  %v802 = vmin.f32 %v738, 6.0
  %v803 = vmin.f32 %v739, 6.0
  %v804 = vmin.f32 %v740, 6.0
  %v805 = vmin.f32 %v741, 6.0
  %v806 = vmin.f32 %v742, 6.0
  %v807 = vmin.f32 %v743, 6.0
  %v808 = vmin.f32 %v744, 6.0
  %v809 = vmin.f32 %v745, 6.0
  %v810 = vmin.f32 %v746, 6.0
  %v811 = vmin.f32 %v747, 6.0
  %v812 = vmin.f32 %v748, 6.0
  %v813 = vmin.f32 %v749, 6.0
  %v814 = vmin.f32 %v750, 6.0
  %v815 = vmin.f32 %v751, 6.0
  %v816 = vmin.f32 %v752, 6.0
  %v817 = vmin.f32 %v753, 6.0
  %v818 = vmin.f32 %v754, 6.0
  %v819 = vmin.f32 %v755, 6.0
  %v820 = vmin.f32 %v756, 6.0
  %v821 = vmin.f32 %v757, 6.0
  %v822 = vmin.f32 %v758, 6.0
  %v823 = vmin.f32 %v759, 6.0
  %v824 = vmin.f32 %v760, 6.0
  %v825 = vmin.f32 %v761, 6.0
  %v826 = vmin.f32 %v762, 6.0
  %v827 = vmin.f32 %v763, 6.0
  %v828 = vmin.f32 %v764, 6.0
  %v829 = vmin.f32 %v765, 6.0
  %v830 = vmin.f32 %v766, 6.0
  %v831 = vmin.f32 %v767, 6.0
  %v832 = vmin.f32 %v768, 6.0
  %v833 = vmin.f32 %v769, 6.0
  %v834 = vmin.f32 %v770, 6.0
  %v835 = vmin.f32 %v771, 6.0
  %v836 = vmin.f32 %v772, 6.0
  %v837 = vmin.f32 %v773, 6.0
  %v838 = vmin.f32 %v774, 6.0
  %v839 = vmin.f32 %v775, 6.0
  %v840 = vmin.f32 %v776, 6.0
  %v841 = vmin.f32 %v777, 6.0
  %v842 = vmin.f32 %v778, 6.0
  %v843 = vmin.f32 %v779, 6.0
  %v844 = vmin.f32 %v780, 6.0
  %v845 = vmin.f32 %v781, 6.0
  %v846 = vmul.f32 %v400, %v782
  %v847 = vmul.f32 %v403, %v783
  %v848 = vmul.f32 %v408, %v784
  %v849 = vmul.f32 %v411, %v785
  %v850 = vmul.f32 %v416, %v786
  %v851 = vmul.f32 %v419, %v787
  %v852 = vmul.f32 %v424, %v788
  %v853 = vmul.f32 %v427, %v789
  %v854 = vmul.f32 %v432, %v790
  %v855 = vmul.f32 %v435, %v791
  %v856 = vmul.f32 %v440, %v792
  %v857 = vmul.f32 %v443, %v793
  %v858 = vmul.f32 %v448, %v794
  %v859 = vmul.f32 %v451, %v795
  %v860 = vmul.f32 %v456, %v796
  %v861 = vmul.f32 %v459, %v797
  %v862 = vmul.f32 %v464, %v798
  %v863 = vmul.f32 %v467, %v799
  %v864 = vmul.f32 %v472, %v800
  %v865 = vmul.f32 %v475, %v801
  %v866 = vmul.f32 %v480, %v802
  %v867 = vmul.f32 %v483, %v803
  %v868 = vmul.f32 %v488, %v804
  %v869 = vmul.f32 %v491, %v805
  %v870 = vmul.f32 %v496, %v806
  %v871 = vmul.f32 %v499, %v807
  %v872 = vmul.f32 %v504, %v808
  %v873 = vmul.f32 %v507, %v809
  %v874 = vmul.f32 %v512, %v810
  %v875 = vmul.f32 %v515, %v811
  %v876 = vmul.f32 %v520, %v812
  %v877 = vmul.f32 %v523, %v813
  %v878 = vmul.f32 %v528, %v814
  %v879 = vmul.f32 %v531, %v815
  %v880 = vmul.f32 %v536, %v816
  %v881 = vmul.f32 %v539, %v817
  %v882 = vmul.f32 %v544, %v818
  %v883 = vmul.f32 %v547, %v819
  %v884 = vmul.f32 %v552, %v820
  %v885 = vmul.f32 %v555, %v821
  %v886 = vmul.f32 %v560, %v822
  %v887 = vmul.f32 %v563, %v823
  %v888 = vmul.f32 %v568, %v824
  %v889 = vmul.f32 %v571, %v825
  %v890 = vmul.f32 %v576, %v826
  %v891 = vmul.f32 %v579, %v827
  %v892 = vmul.f32 %v584, %v828
  %v893 = vmul.f32 %v587, %v829
  %v894 = vmul.f32 %v592, %v830
  %v895 = vmul.f32 %v595, %v831
  %v896 = vmul.f32 %v600, %v832
  %v897 = vmul.f32 %v603, %v833
  %v898 = vmul.f32 %v608, %v834
  %v899 = vmul.f32 %v611, %v835
  %v900 = vmul.f32 %v616, %v836
  %v901 = vmul.f32 %v619, %v837
  %v902 = vmul.f32 %v624, %v838
  %v903 = vmul.f32 %v627, %v839
  %v904 = vmul.f32 %v632, %v840
  %v905 = vmul.f32 %v635, %v841
  %v906 = vmul.f32 %v640, %v842
  %v907 = vmul.f32 %v643, %v843
  %v908 = vmul.f32 %v648, %v844
  %v909 = vmul.f32 %v651, %v845
  %v910 = vmul.f32 %v846, 0.16666667
  %v911 = vmul.f32 %v847, 0.16666667
  %v912 = vmul.f32 %v848, 0.16666667
  %v913 = vmul.f32 %v849, 0.16666667
  %v914 = vmul.f32 %v850, 0.16666667
  %v915 = vmul.f32 %v851, 0.16666667
  %v916 = vmul.f32 %v852, 0.16666667
  %v917 = vmul.f32 %v853, 0.16666667
  %v918 = vmul.f32 %v854, 0.16666667
  %v919 = vmul.f32 %v855, 0.16666667
  %v920 = vmul.f32 %v856, 0.16666667
  %v921 = vmul.f32 %v857, 0.16666667
  %v922 = vmul.f32 %v858, 0.16666667
  %v923 = vmul.f32 %v859, 0.16666667
  %v924 = vmul.f32 %v860, 0.16666667
  %v925 = vmul.f32 %v861, 0.16666667
  %v926 = vmul.f32 %v862, 0.16666667
  %v927 = vmul.f32 %v863, 0.16666667
  %v928 = vmul.f32 %v864, 0.16666667
  %v929 = vmul.f32 %v865, 0.16666667
  %v930 = vmul.f32 %v866, 0.16666667
  %v931 = vmul.f32 %v867, 0.16666667
  %v932 = vmul.f32 %v868, 0.16666667
  %v933 = vmul.f32 %v869, 0.16666667
  %v934 = vmul.f32 %v870, 0.16666667
  %v935 = vmul.f32 %v871, 0.16666667
  %v936 = vmul.f32 %v872, 0.16666667
  %v937 = vmul.f32 %v873, 0.16666667
  %v938 = vmul.f32 %v874, 0.16666667
  %v939 = vmul.f32 %v875, 0.16666667
  %v940 = vmul.f32 %v876, 0.16666667
  %v941 = vmul.f32 %v877, 0.16666667
  %v942 = vmul.f32 %v878, 0.16666667
  %v943 = vmul.f32 %v879, 0.16666667
  %v944 = vmul.f32 %v880, 0.16666667
  %v945 = vmul.f32 %v881, 0.16666667
  %v946 = vmul.f32 %v882, 0.16666667
  %v947 = vmul.f32 %v883, 0.16666667
  %v948 = vmul.f32 %v884, 0.16666667
  %v949 = vmul.f32 %v885, 0.16666667
  %v950 = vmul.f32 %v886, 0.16666667
  %v951 = vmul.f32 %v887, 0.16666667
  %v952 = vmul.f32 %v888, 0.16666667
  %v953 = vmul.f32 %v889, 0.16666667
  %v954 = vmul.f32 %v890, 0.16666667
  %v955 = vmul.f32 %v891, 0.16666667
  %v956 = vmul.f32 %v892, 0.16666667
  %v957 = vmul.f32 %v893, 0.16666667
  %v958 = vmul.f32 %v894, 0.16666667
  %v959 = vmul.f32 %v895, 0.16666667
  %v960 = vmul.f32 %v896, 0.16666667
  %v961 = vmul.f32 %v897, 0.16666667
  %v962 = vmul.f32 %v898, 0.16666667
  %v963 = vmul.f32 %v899, 0.16666667
  %v964 = vmul.f32 %v900, 0.16666667
  %v965 = vmul.f32 %v901, 0.16666667
  %v966 = vmul.f32 %v902, 0.16666667
  %v967 = vmul.f32 %v903, 0.16666667
  %v968 = vmul.f32 %v904, 0.16666667
  %v969 = vmul.f32 %v905, 0.16666667
  %v970 = vmul.f32 %v906, 0.16666667
  %v971 = vmul.f32 %v907, 0.16666667
  %v972 = vmul.f32 %v908, 0.16666667
  %v973 = vmul.f32 %v909, 0.16666667
  %v974 = vpack.c.bf16 %v911, %v910
  %v975 = vpack.c.bf16 %v913, %v912
  %v976 = vpack.c.bf16 %v915, %v914
  %v977 = vpack.c.bf16 %v917, %v916
  %v978 = vpack.c.bf16 %v919, %v918
  %v979 = vpack.c.bf16 %v921, %v920
  %v980 = vpack.c.bf16 %v923, %v922
  %v981 = vpack.c.bf16 %v925, %v924
  %v982 = vpack.c.bf16 %v927, %v926
  %v983 = vpack.c.bf16 %v929, %v928
  %v984 = vpack.c.bf16 %v931, %v930
  %v985 = vpack.c.bf16 %v933, %v932
  %v986 = vpack.c.bf16 %v935, %v934
  %v987 = vpack.c.bf16 %v937, %v936
  %v988 = vpack.c.bf16 %v939, %v938
  %v989 = vpack.c.bf16 %v941, %v940
  %v990 = vpack.c.bf16 %v943, %v942
  %v991 = vpack.c.bf16 %v945, %v944
  %v992 = vpack.c.bf16 %v947, %v946
  %v993 = vpack.c.bf16 %v949, %v948
  %v994 = vpack.c.bf16 %v951, %v950
  %v995 = vpack.c.bf16 %v953, %v952
  %v996 = vpack.c.bf16 %v955, %v954
  %v997 = vpack.c.bf16 %v957, %v956
  %v998 = vpack.c.bf16 %v959, %v958
  %v999 = vpack.c.bf16 %v961, %v960
  %v1000 = vpack.c.bf16 %v963, %v962
  %v1001 = vpack.c.bf16 %v965, %v964
  %v1002 = vpack.c.bf16 %v967, %v966
  %v1003 = vpack.c.bf16 %v969, %v968
  %v1004 = vpack.c.bf16 %v971, %v970
  %v1005 = vpack.c.bf16 %v973, %v972
  %v1038 = vunpack.c.l.b16 %v974
  %v1039 = vunpack.c.h.b16 %v974
  %v1040 = vunpack.c.l.b16 %v975
  %v1041 = vunpack.c.h.b16 %v975
  %v1042 = vunpack.c.l.b16 %v976
  %v1043 = vunpack.c.h.b16 %v976
  %v1044 = vunpack.c.l.b16 %v977
  %v1045 = vunpack.c.h.b16 %v977
  %v1046 = vunpack.c.l.b16 %v978
  %v1047 = vunpack.c.h.b16 %v978
  %v1048 = vunpack.c.l.b16 %v979
  %v1049 = vunpack.c.h.b16 %v979
  %v1050 = vunpack.c.l.b16 %v980
  %v1051 = vunpack.c.h.b16 %v980
  %v1052 = vunpack.c.l.b16 %v981
  %v1053 = vunpack.c.h.b16 %v981
  %v1054 = vunpack.c.l.b16 %v982
  %v1055 = vunpack.c.h.b16 %v982
  %v1056 = vunpack.c.l.b16 %v983
  %v1057 = vunpack.c.h.b16 %v983
  %v1058 = vunpack.c.l.b16 %v984
  %v1059 = vunpack.c.h.b16 %v984
  %v1060 = vunpack.c.l.b16 %v985
  %v1061 = vunpack.c.h.b16 %v985
  %v1062 = vunpack.c.l.b16 %v986
  %v1063 = vunpack.c.h.b16 %v986
  %v1064 = vunpack.c.l.b16 %v987
  %v1065 = vunpack.c.h.b16 %v987
  %v1066 = vunpack.c.l.b16 %v988
  %v1067 = vunpack.c.h.b16 %v988
  %v1068 = vunpack.c.l.b16 %v989
  %v1069 = vunpack.c.h.b16 %v989
  %v1070 = vunpack.c.l.b16 %v990
  %v1071 = vunpack.c.h.b16 %v990
  %v1072 = vunpack.c.l.b16 %v991
  %v1073 = vunpack.c.h.b16 %v991
  %v1074 = vunpack.c.l.b16 %v992
  %v1075 = vunpack.c.h.b16 %v992
  %v1076 = vunpack.c.l.b16 %v993
  %v1077 = vunpack.c.h.b16 %v993
  %v1078 = vunpack.c.l.b16 %v994
  %v1079 = vunpack.c.h.b16 %v994
  %v1080 = vunpack.c.l.b16 %v995
  %v1081 = vunpack.c.h.b16 %v995
  %v1082 = vunpack.c.l.b16 %v996
  %v1083 = vunpack.c.h.b16 %v996
  %v1084 = vunpack.c.l.b16 %v997
  %v1085 = vunpack.c.h.b16 %v997
  %v1086 = vunpack.c.l.b16 %v998
  %v1087 = vunpack.c.h.b16 %v998
  %v1088 = vunpack.c.l.b16 %v999
  %v1089 = vunpack.c.h.b16 %v999
  %v1090 = vunpack.c.l.b16 %v1000
  %v1091 = vunpack.c.h.b16 %v1000
  %v1092 = vunpack.c.l.b16 %v1001
  %v1093 = vunpack.c.h.b16 %v1001
  %v1094 = vunpack.c.l.b16 %v1002
  %v1095 = vunpack.c.h.b16 %v1002
  %v1096 = vunpack.c.l.b16 %v1003
  %v1097 = vunpack.c.h.b16 %v1003
  %v1098 = vunpack.c.l.b16 %v1004
  %v1099 = vunpack.c.h.b16 %v1004
  %v1100 = vunpack.c.l.b16 %v1005
  %v1101 = vunpack.c.h.b16 %v1005
  %v1102 = vpack.c.b16 %v1038, %v1038
  %v1103 = vpack.c.b16 %v1039, %v1039
  %v1104 = vpack.c.b16 %v1040, %v1040
  %v1105 = vpack.c.b16 %v1041, %v1041
  %v1106 = vpack.c.b16 %v1042, %v1042
  %v1107 = vpack.c.b16 %v1043, %v1043
  %v1108 = vpack.c.b16 %v1044, %v1044
  %v1109 = vpack.c.b16 %v1045, %v1045
  %v1110 = vpack.c.b16 %v1046, %v1046
  %v1111 = vpack.c.b16 %v1047, %v1047
  %v1112 = vpack.c.b16 %v1048, %v1048
  %v1113 = vpack.c.b16 %v1049, %v1049
  %v1114 = vpack.c.b16 %v1050, %v1050
  %v1115 = vpack.c.b16 %v1051, %v1051
  %v1116 = vpack.c.b16 %v1052, %v1052
  %v1117 = vpack.c.b16 %v1053, %v1053
  %v1118 = vpack.c.b16 %v1054, %v1054
  %v1119 = vpack.c.b16 %v1055, %v1055
  %v1120 = vpack.c.b16 %v1056, %v1056
  %v1121 = vpack.c.b16 %v1057, %v1057
  %v1122 = vpack.c.b16 %v1058, %v1058
  %v1123 = vpack.c.b16 %v1059, %v1059
  %v1124 = vpack.c.b16 %v1060, %v1060
  %v1125 = vpack.c.b16 %v1061, %v1061
  %v1126 = vpack.c.b16 %v1062, %v1062
  %v1127 = vpack.c.b16 %v1063, %v1063
  %v1128 = vpack.c.b16 %v1064, %v1064
  %v1129 = vpack.c.b16 %v1065, %v1065
  %v1130 = vpack.c.b16 %v1066, %v1066
  %v1131 = vpack.c.b16 %v1067, %v1067
  %v1132 = vpack.c.b16 %v1068, %v1068
  %v1133 = vpack.c.b16 %v1069, %v1069
  %v1134 = vpack.c.b16 %v1070, %v1070
  %v1135 = vpack.c.b16 %v1071, %v1071
  %v1136 = vpack.c.b16 %v1072, %v1072
  %v1137 = vpack.c.b16 %v1073, %v1073
  %v1138 = vpack.c.b16 %v1074, %v1074
  %v1139 = vpack.c.b16 %v1075, %v1075
  %v1140 = vpack.c.b16 %v1076, %v1076
  %v1141 = vpack.c.b16 %v1077, %v1077
  %v1142 = vpack.c.b16 %v1078, %v1078
  %v1143 = vpack.c.b16 %v1079, %v1079
  %v1144 = vpack.c.b16 %v1080, %v1080
  %v1145 = vpack.c.b16 %v1081, %v1081
  %v1146 = vpack.c.b16 %v1082, %v1082
  %v1147 = vpack.c.b16 %v1083, %v1083
  %v1148 = vpack.c.b16 %v1084, %v1084
  %v1149 = vpack.c.b16 %v1085, %v1085
  %v1150 = vpack.c.b16 %v1086, %v1086
  %v1151 = vpack.c.b16 %v1087, %v1087
  %v1152 = vpack.c.b16 %v1088, %v1088
  %v1153 = vpack.c.b16 %v1089, %v1089
  %v1154 = vpack.c.b16 %v1090, %v1090
  %v1155 = vpack.c.b16 %v1091, %v1091
  %v1156 = vpack.c.b16 %v1092, %v1092
  %v1157 = vpack.c.b16 %v1093, %v1093
  %v1158 = vpack.c.b16 %v1094, %v1094
  %v1159 = vpack.c.b16 %v1095, %v1095
  %v1160 = vpack.c.b16 %v1096, %v1096
  %v1161 = vpack.c.b16 %v1097, %v1097
  %v1162 = vpack.c.b16 %v1098, %v1098
  %v1163 = vpack.c.b16 %v1099, %v1099
  %v1164 = vpack.c.b16 %v1100, %v1100
  %v1165 = vpack.c.b16 %v1101, %v1101
  %vm1230 = vcmask 60416
  %1231 = vst.msk [vmem:[%s3] sm:$0xf] %vm1230, %v1102
  %1232 = vst.msk [vmem:[%s3 + $0x4] sm:$0xf] %vm1230, %v1103
  %1233 = vst.msk [vmem:[%s3 + $0x8] sm:$0xf] %vm1230, %v1104
  %1234 = vst.msk [vmem:[%s3 + $0xc] sm:$0xf] %vm1230, %v1105
  %1235 = vst.msk [vmem:[%s3 + $0x10] sm:$0xf] %vm1230, %v1106
  %1236 = vst.msk [vmem:[%s3 + $0x14] sm:$0xf] %vm1230, %v1107
  %1237 = vst.msk [vmem:[%s3 + $0x18] sm:$0xf] %vm1230, %v1108
  %1238 = vst.msk [vmem:[%s3 + $0x1c] sm:$0xf] %vm1230, %v1109
  %1239 = vst.msk [vmem:[%s3 + $0x20] sm:$0xf] %vm1230, %v1110
  %1240 = vst.msk [vmem:[%s3 + $0x24] sm:$0xf] %vm1230, %v1111
  %1241 = vst.msk [vmem:[%s3 + $0x28] sm:$0xf] %vm1230, %v1112
  %1242 = vst.msk [vmem:[%s3 + $0x2c] sm:$0xf] %vm1230, %v1113
  %1243 = vst.msk [vmem:[%s3 + $0x30] sm:$0xf] %vm1230, %v1114
  %1244 = vst.msk [vmem:[%s3 + $0x34] sm:$0xf] %vm1230, %v1115
  %1245 = vst.msk [vmem:[%s3 + $0x38] sm:$0xf] %vm1230, %v1116
  %1246 = vst.msk [vmem:[%s3 + $0x3c] sm:$0xf] %vm1230, %v1117
  %1247 = vst.msk [vmem:[%s3 + $0x40] sm:$0xf] %vm1230, %v1118
  %1248 = vst.msk [vmem:[%s3 + $0x44] sm:$0xf] %vm1230, %v1119
  %1249 = vst.msk [vmem:[%s3 + $0x48] sm:$0xf] %vm1230, %v1120
  %1250 = vst.msk [vmem:[%s3 + $0x4c] sm:$0xf] %vm1230, %v1121
  %1251 = vst.msk [vmem:[%s3 + $0x50] sm:$0xf] %vm1230, %v1122
  %1252 = vst.msk [vmem:[%s3 + $0x54] sm:$0xf] %vm1230, %v1123
  %1253 = vst.msk [vmem:[%s3 + $0x58] sm:$0xf] %vm1230, %v1124
  %1254 = vst.msk [vmem:[%s3 + $0x5c] sm:$0xf] %vm1230, %v1125
  %1255 = vst.msk [vmem:[%s3 + $0x60] sm:$0xf] %vm1230, %v1126
  %1256 = vst.msk [vmem:[%s3 + $0x64] sm:$0xf] %vm1230, %v1127
  %1257 = vst.msk [vmem:[%s3 + $0x68] sm:$0xf] %vm1230, %v1128
  %1258 = vst.msk [vmem:[%s3 + $0x6c] sm:$0xf] %vm1230, %v1129
  %1259 = vst.msk [vmem:[%s3 + $0x70] sm:$0xf] %vm1230, %v1130
  %1260 = vst.msk [vmem:[%s3 + $0x74] sm:$0xf] %vm1230, %v1131
  %1261 = vst.msk [vmem:[%s3 + $0x78] sm:$0xf] %vm1230, %v1132
  %1262 = vst.msk [vmem:[%s3 + $0x7c] sm:$0xf] %vm1230, %v1133
  %1263 = vst.msk [vmem:[%s3 + $0x80] sm:$0xf] %vm1230, %v1134
  %1264 = vst.msk [vmem:[%s3 + $0x84] sm:$0xf] %vm1230, %v1135
  %1265 = vst.msk [vmem:[%s3 + $0x88] sm:$0xf] %vm1230, %v1136
  %1266 = vst.msk [vmem:[%s3 + $0x8c] sm:$0xf] %vm1230, %v1137
  %1267 = vst.msk [vmem:[%s3 + $0x90] sm:$0xf] %vm1230, %v1138
  %1268 = vst.msk [vmem:[%s3 + $0x94] sm:$0xf] %vm1230, %v1139
  %1269 = vst.msk [vmem:[%s3 + $0x98] sm:$0xf] %vm1230, %v1140
  %1270 = vst.msk [vmem:[%s3 + $0x9c] sm:$0xf] %vm1230, %v1141
  %1271 = vst.msk [vmem:[%s3 + $0xa0] sm:$0xf] %vm1230, %v1142
  %1272 = vst.msk [vmem:[%s3 + $0xa4] sm:$0xf] %vm1230, %v1143
  %1273 = vst.msk [vmem:[%s3 + $0xa8] sm:$0xf] %vm1230, %v1144
  %1274 = vst.msk [vmem:[%s3 + $0xac] sm:$0xf] %vm1230, %v1145
  %1275 = vst.msk [vmem:[%s3 + $0xb0] sm:$0xf] %vm1230, %v1146
  %1276 = vst.msk [vmem:[%s3 + $0xb4] sm:$0xf] %vm1230, %v1147
  %1277 = vst.msk [vmem:[%s3 + $0xb8] sm:$0xf] %vm1230, %v1148
  %1278 = vst.msk [vmem:[%s3 + $0xbc] sm:$0xf] %vm1230, %v1149
  %1279 = vst.msk [vmem:[%s3 + $0xc0] sm:$0xf] %vm1230, %v1150
  %1280 = vst.msk [vmem:[%s3 + $0xc4] sm:$0xf] %vm1230, %v1151
  %1281 = vst.msk [vmem:[%s3 + $0xc8] sm:$0xf] %vm1230, %v1152
  %1282 = vst.msk [vmem:[%s3 + $0xcc] sm:$0xf] %vm1230, %v1153
  %1283 = vst.msk [vmem:[%s3 + $0xd0] sm:$0xf] %vm1230, %v1154
  %1284 = vst.msk [vmem:[%s3 + $0xd4] sm:$0xf] %vm1230, %v1155
  %1285 = vst.msk [vmem:[%s3 + $0xd8] sm:$0xf] %vm1230, %v1156
  %1286 = vst.msk [vmem:[%s3 + $0xdc] sm:$0xf] %vm1230, %v1157
  %1287 = vst.msk [vmem:[%s3 + $0xe0] sm:$0xf] %vm1230, %v1158
  %1288 = vst.msk [vmem:[%s3 + $0xe4] sm:$0xf] %vm1230, %v1159
  %1289 = vst.msk [vmem:[%s3 + $0xe8] sm:$0xf] %vm1230, %v1160
  %1290 = vst.msk [vmem:[%s3 + $0xec] sm:$0xf] %vm1230, %v1161
  %1291 = vst.msk [vmem:[%s3 + $0xf0] sm:$0xf] %vm1230, %v1162
  %1292 = vst.msk [vmem:[%s3 + $0xf4] sm:$0xf] %vm1230, %v1163
  %1293 = vst.msk [vmem:[%s3 + $0xf8] sm:$0xf] %vm1230, %v1164
  %1294 = vst.msk [vmem:[%s3 + $0xfc] sm:$0xf] %vm1230, %v1165
  // Predicated region
  $region14: #{tpu_custom_call.1} parent=0 // pred_check
    _
  $region15: #{tpu_custom_call.1} parent=0 // pred_check_branch
    %1296 = sbr.rel (0) target = $region17
  $region16: #{tpu_custom_call.1} parent=0 // pred_region
    _
  $region17: #{tpu_custom_call.1} parent=0 // pred_fallthru
    _
  // Predicated region
  $region18: #{tpu_custom_call.1} parent=0 // pred_check
    _
  $region19: #{tpu_custom_call.1} parent=0 // pred_check_branch
    %1298 = sbr.rel (0) target = $region21
  $region20: #{tpu_custom_call.1} parent=0 // pred_region
    _
  $region21: #{tpu_custom_call.1} parent=0 // pred_fallthru
    _

</llo_original>
